<compile_context>
chip_gen: v5e
topology: v5e:2x2
jax: 0.10.0
libtpu: 0.0.40
codegen_flags: <defaults>
</compile_context>

<pallas_src>
import jax
import jax.numpy as jnp
from jax.experimental import pallas as pl
from jax.experimental.pallas import tpu as pltpu


def _round_up(x, m):
    return ((x + m - 1) // m) * m


def _mlp_kernel(x_ref, wc_ref, o_ref):
    # One MXU matmul per batch tile: [tm, F](bf16) @ [F, Cp](bf16) -> f32 acc.
    o_ref[...] = jnp.dot(
        x_ref[...].astype(jnp.bfloat16),
        wc_ref[...],
        preferred_element_type=jnp.float32,
    ).astype(o_ref.dtype)


def prepare_params(w1, w2):
    """One-time parameter setup (amortized over all forward calls).

    w1: [F, F] (torch nn.Linear layout), w2: [C, F] (torch nn.Linear layout).
    Returns the folded, class-padded, bf16 weight Wc_pad: [F, Cp] with
    Cp = ceil(C/128)*128, such that forward(x) = (x @ Wc_pad)[:, :C].
    Folding is exact only because the module has no activation between the
    two Linears (matches the reference PyTorch module).
    """
    C = w2.shape[0]
    wc = jnp.dot(w2, w1, preferred_element_type=jnp.float32).T  # [F, C] f32
    cp = _round_up(C, 128)
    wc = jnp.pad(wc, ((0, 0), (0, cp - C)))                     # lane-dense
    return wc.astype(jnp.bfloat16)


def neural_network_forward(x, wc_pad, num_classes, tm=512, force_pallas=False,
                           out_dtype=None):
    """x: [B, F]; wc_pad: [F, Cp] from prepare_params. Returns [B, num_classes]."""
    B, F = x.shape
    Cp = wc_pad.shape[1]
    out_dtype = out_dtype if out_dtype is not None else x.dtype

    # Tiny problems: one-grid-step Pallas wall clock is dominated by
    # custom-call + DMA setup; XLA's fused dot is strictly cheaper.
    if not force_pallas and B <= 64 and F <= 128:
        out = jnp.dot(x.astype(jnp.bfloat16), wc_pad,
                      preferred_element_type=jnp.float32)
        return out[:, :num_classes].astype(out_dtype)

    # Batch tile: multiple of 8 (sublane), no larger than needed, and capped so
    # that large B yields >= 2 grid steps (v7x megacore sharding of "parallel").
    tm_eff = max(8, min(tm, _round_up(pl.cdiv(B, 2), 8), _round_up(B, 8)))
    grid = (pl.cdiv(B, tm_eff),)  # ragged last block handled by Pallas masking

    x_item = jnp.dtype(x.dtype).itemsize
    o_item = jnp.dtype(out_dtype).itemsize
    w_item = jnp.dtype(wc_pad.dtype).itemsize
    cost = pl.CostEstimate(
        flops=2 * B * F * Cp,
        transcendentals=0,
        bytes_accessed=B * F * x_item + F * Cp * w_item + B * Cp * o_item,
    )

    # VMEM footprint: 2x x-tile buffers + 1 resident weight + 2x output buffers.
    need = (2 * tm_eff * F * x_item
            + 1 * F * Cp * w_item
            + 2 * tm_eff * Cp * o_item)
    vmem_limit = None
    if need > 12 * 1024 * 1024:
        vmem_limit = min(int(1.5 * need) + (1 << 20), 128 * 1024 * 1024)

    out = pl.pallas_call(
        _mlp_kernel,
        out_shape=jax.ShapeDtypeStruct((B, Cp), out_dtype),
        grid=grid,
        in_specs=[
            # batch tile marches over rows
            pl.BlockSpec((tm_eff, F), lambda i: (i, 0)),
            # folded weight: constant block index -> resident; single-buffered
            pl.BlockSpec((F, Cp), lambda i: (0, 0),
                         pipeline_mode=pl.Buffered(1)),
        ],
        # lane-dense output tile: last dim Cp is a multiple of 128
        out_specs=pl.BlockSpec((tm_eff, Cp), lambda i: (i, 0)),
        compiler_params=pltpu.CompilerParams(
            dimension_semantics=("parallel",),
            vmem_limit_bytes=vmem_limit,
        ),
        cost_estimate=cost,
    )(x, wc_pad)

    # TODO(synk): if the consumer can read the padded [B, Cp] slab (masking
    # columns >= num_classes), drop this slice to save an HBM pass.
    return out[:, :num_classes]


if __name__ == "__main__":
    key = jax.random.PRNGKey(0)
    kx, k1, k2, kx2, k3, k4 = jax.random.split(key, 6)

    # --- small demo shapes consistent with the module ---
    batch, featureDimension, numClasses = 8, 32, 4
    bound = 1.0 / (featureDimension ** 0.5)
    x = jax.random.normal(kx, (batch, featureDimension), dtype=jnp.float32)
    w1 = jax.random.uniform(k1, (featureDimension, featureDimension),
                            minval=-bound, maxval=bound, dtype=jnp.float32)
    w2 = jax.random.uniform(k2, (numClasses, featureDimension),
                            minval=-bound, maxval=bound, dtype=jnp.float32)

    wc_pad = prepare_params(w1, w2)

    # Force the Pallas path at the demo shape to exercise the kernel.
    out = neural_network_forward(x, wc_pad, numClasses, force_pallas=True)
    out = jax.block_until_ready(out)
    ref = (x @ w1.T) @ w2.T
    assert out.shape == (batch, numClasses)
    assert jnp.allclose(out, ref, atol=3e-2, rtol=3e-2), \
        float(jnp.max(jnp.abs(out - ref)))

    # Tiny-shape fast path agrees as well.
    out_fast = jax.block_until_ready(
        neural_network_forward(x, wc_pad, numClasses))
    assert jnp.allclose(out_fast, ref, atol=3e-2, rtol=3e-2)

    # --- ragged batch through the natural Pallas path (2 grid steps, partial
    #     last block, no wrapper-side padding) ---
    B2, F2, C2 = 300, 128, 4
    bound2 = 1.0 / (F2 ** 0.5)
    x2 = jax.random.normal(kx2, (B2, F2), dtype=jnp.float32)
    w1b = jax.random.uniform(k3, (F2, F2), minval=-bound2, maxval=bound2,
                             dtype=jnp.float32)
    w2b = jax.random.uniform(k4, (C2, F2), minval=-bound2, maxval=bound2,
                             dtype=jnp.float32)
    wc2 = prepare_params(w1b, w2b)
    out2 = jax.block_until_ready(neural_network_forward(x2, wc2, C2))
    ref2 = (x2 @ w1b.T) @ w2b.T
    assert out2.shape == (B2, C2)
    assert jnp.allclose(out2, ref2, atol=5e-2, rtol=5e-2), \
        float(jnp.max(jnp.abs(out2 - ref2)))

    print("KERNEL_OK")
</pallas_src>

<mosaic_0001>
module attributes {stable_mosaic.version = 11 : i64} {
  func.func @_mlp_kernel(%arg0: i32, %arg1: memref<8x32xf32, #tpu.memory_space<vmem>>, %arg2: memref<32x128xbf16, #tpu.memory_space<vmem>>, %arg3: memref<8x128xf32, #tpu.memory_space<vmem>>) attributes {dimension_semantics = [#tpu.dimension_semantics<parallel>], iteration_bounds = array<i64: 1>, scalar_prefetch = 0 : i64, scratch_operands = 0 : i64, tpu.core_type = #tpu.core_type<tc>, window_params = [{transform_indices = @transform_0, window_bounds = array<i64: 8, 32>}, {pipeline_mode = #tpu.pipeline_mode<synchronous>, transform_indices = @transform_1, window_bounds = array<i64: 32, 128>}, {transform_indices = @transform_2, window_bounds = array<i64: 8, 128>}]} {
    %c0 = arith.constant 0 : index
    %c0_0 = arith.constant 0 : index
    %0 = vector.load %arg1[%c0, %c0_0] : memref<8x32xf32, #tpu.memory_space<vmem>>, vector<8x32xf32>
    %1 = arith.truncf %0 : vector<8x32xf32> to vector<8x32xbf16>
    %c0_1 = arith.constant 0 : index
    %c0_2 = arith.constant 0 : index
    %2 = vector.load %arg2[%c0_1, %c0_2] : memref<32x128xbf16, #tpu.memory_space<vmem>>, vector<32x128xbf16>
    %cst = arith.constant dense<0.000000e+00> : vector<8x128xf32>
    %3 = tpu.matmul %1, %2, %cst {dimension_numbers = #tpu.dot_dimension_numbers<[1], [0], [0], [1], [0, 0, 1, 1], [], []>} : vector<8x32xbf16>, vector<32x128xbf16>, vector<8x128xf32> -> vector<8x128xf32>
    %c0_3 = arith.constant 0 : index
    %c0_4 = arith.constant 0 : index
    %4 = vector.load %arg3[%c0_3, %c0_4] : memref<8x128xf32, #tpu.memory_space<vmem>>, vector<8x128xf32>
    tpu.vector_store %arg3[%c0_3, %c0_4], %3 {strides = array<i32>} : memref<8x128xf32, #tpu.memory_space<vmem>>, vector<8x128xf32>,
    return
  }
  func.func @transform_0(%arg0: i32) -> (i32, i32) {
    %c0_i32 = arith.constant 0 : i32
    %c0_i32_0 = arith.constant 0 : i32
    return %arg0, %c0_i32 : i32, i32
  }
  func.func @transform_1(%arg0: i32) -> (i32, i32) {
    %c0_i32 = arith.constant 0 : i32
    %c0_i32_0 = arith.constant 0 : i32
    %c0_i32_1 = arith.constant 0 : i32
    return %c0_i32, %c0_i32_0 : i32, i32
  }
  func.func @transform_2(%arg0: i32) -> (i32, i32) {
    %c0_i32 = arith.constant 0 : i32
    %c0_i32_0 = arith.constant 0 : i32
    return %arg0, %c0_i32 : i32, i32
  }
}

</mosaic_0001>

<llo_original>
// kernel: tpu_custom_call.1
$region0: #{tpu_custom_call.1}
  #allocation0 [shape = 'u32[]', space=smem, size = 0x4, offset = 0x4, fixed_abs, tag = 'smem constant byte address 0x4 - core index']
  #allocation1 [shape = 'u32[72,128]{1,0:T(1,128)}', space=vmem, size = 0x9000, scoped, tag = 'internal scratch']
  %s0 = inlined_call_operand.hbm [shape: f32[8,32], index: 0, kind: input, shape index: {}]
  %s1 = inlined_call_operand.hbm [shape: bf16[32,128], index: 1, kind: input, shape index: {}]
  %s2 = inlined_call_operand.hbm [shape: f32[8,128], index: 2, kind: output, shape index: {}]
  %s3 = sld [smem:[#allocation0]]
  $region26: #{tpu_custom_call.1} parent=0
    _
  %s5 = ssub.s32 1, %s3
  %s6 = scalar_select 0, %s5, %s3
  $region1: #{tpu_custom_call.1} parent=0
    #allocation2 [shape = 'u8[4096]{0}', space=vmem, size = 0x1000, scoped, tag = 'input window, operand 0, single buffered']
    #allocation3 [shape = 's32[1]{0}', space=sflag, size = 0x4, scoped, tag = 'scoped memory for tpu_custom_call.1']
    #allocation4 [shape = 's32[1]{0}', space=sflag, size = 0x4, scoped, tag = 'scoped memory for tpu_custom_call.1']
    #allocation5 [shape = 'u8[8192]{0}', space=vmem, size = 0x2000, scoped, tag = 'input window, operand 1, single buffered']
    #allocation6 [shape = 's32[1]{0}', space=sflag, size = 0x4, scoped, tag = 'scoped memory for tpu_custom_call.1']
    #allocation7 [shape = 'u8[4096]{0}', space=vmem, size = 0x1000, scoped, tag = 'output window, operand 0, single buffered']
    %7 = vsyncpa [#allocation3], 0
    %8 = vsyncpa [#allocation6], 0
    %9 = vsyncpa [#allocation4], 0
    // Predicated region
    $region2: #{tpu_custom_call.1} parent=1 // pred_check
      _
    $region3: #{tpu_custom_call.1} parent=1 // pred_check_branch
      %11 = sbr.rel (0) target = $region5
    $region4: #{tpu_custom_call.1} parent=1 // pred_region
      %13 = vsyncadd [#allocation3], 0
      %s15 = sshll.u32 %s0, 4
      %s16 = int_to_ptr.hbm [resolvable:$true] %s15
      %s17 = sshll.u32 [#allocation2], 4
      %s18 = int_to_ptr.vmem [resolvable:$true] %s17
      %20 = dma.hbm_to_vmem [thread:$0]  %s16, 128, %s18, [#allocation3]
    $region5: #{tpu_custom_call.1} parent=1 // pred_fallthru
      _
    // Predicated region
    $region6: #{tpu_custom_call.1} parent=1 // pred_check
      _
    $region7: #{tpu_custom_call.1} parent=1 // pred_check_branch
      %22 = sbr.rel (0) target = $region9
    $region8: #{tpu_custom_call.1} parent=1 // pred_region
      %24 = vsyncadd [#allocation6], 0
      %s25 = sshll.u32 %s1, 4
      %s26 = int_to_ptr.hbm [resolvable:$true] %s25
      %s27 = sshll.u32 [#allocation5], 4
      %s28 = int_to_ptr.vmem [resolvable:$true] %s27
      %33 = dma.hbm_to_vmem [thread:$0]  %s26, 256, %s28, [#allocation6], 64, 64, 4
    $region9: #{tpu_custom_call.1} parent=1 // pred_fallthru
      _
    // Predicated region
    $region10: #{tpu_custom_call.1} parent=1 // pred_check
      _
    $region11: #{tpu_custom_call.1} parent=1 // pred_check_branch
      %35 = sbr.rel (0) target = $region13
    $region12: #{tpu_custom_call.1} parent=1 // pred_region
      %37 = dma.done [#allocation3], 128
    $region13: #{tpu_custom_call.1} parent=1 // pred_fallthru
      _
    // Predicated region
    $region14: #{tpu_custom_call.1} parent=1 // pred_check
      _
    $region15: #{tpu_custom_call.1} parent=1 // pred_check_branch
      %39 = sbr.rel (0) target = $region17
    $region16: #{tpu_custom_call.1} parent=1 // pred_region
      %41 = dma.done [#allocation6], 256
    $region17: #{tpu_custom_call.1} parent=1 // pred_fallthru
      _
    %v43 = vld [vmem:[#allocation2] sm:$0xff]
    %v44 = vpack.c.bf16 %v43, %v43
    %v45 = vld [vmem:[#allocation5] sm:$0xf]
    %v46 = vld [vmem:[#allocation5 + $0x4] sm:$0xf]
    %v47 = vld [vmem:[#allocation5 + $0x8] sm:$0xf]
    %v48 = vld [vmem:[#allocation5 + $0xc] sm:$0xf]
    %v53 = vunpack.c.l.b16 %v45
    %v54 = vunpack.c.l.b16 %v46
    %v55 = vunpack.c.l.b16 %v47
    %v56 = vunpack.c.l.b16 %v48
    %v57 = vpack.c.b16 %v54, %v53
    %v58 = vpack.c.b16 %v56, %v55
    %vm61 = vcmask 261120
    %v63 = vsel %vm61, %v44, 0
    %65 = vmatpush.bf16.msra.mxu0 0
    %66 = vmatpush.bf16.msra.mxu0 0
    %67 = vmatpush.bf16.msra.mxu0 0
    %68 = vmatpush.bf16.msra.mxu0 0
    %69 = vmatpush.bf16.msra.mxu0 0
    %70 = vmatpush.bf16.msra.mxu0 0
    %71 = vmatpush.bf16.msra.mxu0 %v58
    %72 = vmatpush.bf16.msra.mxu0 %v57
    %73 = vmatmul.bf16.gmra.mxu0 %v63
    %v74 = vpop.f32.mrf.mxu0
    %v75 = vadd.f32 0.0, %v74
    %v76 = vpop.f32.mrf.mxu0
    %77 = vdwg.mxu0
    %78 = vst [vmem:[#allocation7] sm:$0xff] %v75
    // Predicated region
    $region18: #{tpu_custom_call.1} parent=1 // pred_check
      _
    $region19: #{tpu_custom_call.1} parent=1 // pred_check_branch
      %80 = sbr.rel (0) target = $region21
    $region20: #{tpu_custom_call.1} parent=1 // pred_region
      %82 = vsyncadd [#allocation4], 0
      %s84 = sshll.u32 [#allocation7], 4
      %s85 = int_to_ptr.vmem [resolvable:$true] %s84
      %s86 = sshll.u32 %s2, 4
      %s87 = int_to_ptr.hbm [resolvable:$true] %s86
      %89 = dma.vmem_to_hbm [thread:$0]  %s85, 128, %s87, [#allocation4]
    $region21: #{tpu_custom_call.1} parent=1 // pred_fallthru
      _
    // Predicated region
    $region22: #{tpu_custom_call.1} parent=1 // pred_check
      _
    $region23: #{tpu_custom_call.1} parent=1 // pred_check_branch
      %91 = sbr.rel (0) target = $region25
    $region24: #{tpu_custom_call.1} parent=1 // pred_region
      %93 = dma.done [#allocation4], 128
    $region25: #{tpu_custom_call.1} parent=1 // pred_fallthru
      _
    %94 = vsyncpa [#allocation3], 1
    %95 = vsyncpa [#allocation6], 1
    %96 = vsyncpa [#allocation4], 1

</llo_original>
